<compile_context>
chip_gen: v7x
topology: tpu7x:2x2x1
jax: 0.10.0
libtpu: 0.0.40
codegen_flags: <defaults>
</compile_context>

<pallas_src>
import jax
import jax.numpy as jnp
from jax.experimental import pallas as pl
from jax.experimental.pallas import tpu as pltpu


# ----------------------------------------------------------------------------
# Buffer construction, mirroring Reasonings.__init__ / add_reasonings with a
# RandomReasoningsInitializer.
# ----------------------------------------------------------------------------
def random_reasonings_init(key, distribution):
    """Generate reasonings of shape [num_components, num_classes, 2]."""
    if isinstance(distribution, dict):
        counts = [distribution[k] for k in sorted(distribution)]
    else:
        counts = list(distribution)
    num_classes = len(counts)
    num_components = int(sum(counts))
    return jax.random.uniform(
        key, (num_components, num_classes, 2), dtype=jnp.float32
    )


# ----------------------------------------------------------------------------
# Pallas kernel: forward() == return the reasonings buffer.
# Implemented as a single whole-buffer HBM->HBM DMA (no VMEM staging, no grid).
# ----------------------------------------------------------------------------
def _dma_copy_kernel(r_ref, o_ref, sem):
    cp = pltpu.make_async_copy(r_ref, o_ref, sem)
    cp.start()
    cp.wait()


def reasonings_forward(reasonings: jax.Array) -> jax.Array:
    """Pallas-backed equivalent of Reasonings.forward() (identity pass-through)."""
    return pl.pallas_call(
        _dma_copy_kernel,
        out_shape=jax.ShapeDtypeStruct(reasonings.shape, reasonings.dtype),
        in_specs=[pl.BlockSpec(memory_space=pl.ANY)],
        out_specs=pl.BlockSpec(memory_space=pl.ANY),
        scratch_shapes=[pltpu.SemaphoreType.DMA(())],
    )(reasonings)


class ReasoningsJAX:
    """Minimal JAX mirror of the PyTorch Reasonings module."""

    def __init__(self, distribution, key):
        self._reasonings = random_reasonings_init(key, distribution)

    @property
    def num_classes(self):
        return self._reasonings.shape[1]

    @property
    def reasonings(self):
        return self._reasonings

    def __call__(self):
        # The zero-cost forward would be `return self._reasonings`; the single
        # HBM->HBM DMA below is the cheapest possible Pallas kernel path.
        return reasonings_forward(self._reasonings)


if __name__ == "__main__":
    key = jax.random.PRNGKey(0)
    k1, k2 = jax.random.split(key)

    # Case 1: 3 classes with (2, 3, 3) components -> reasonings of shape
    # [8, 3, 2] (small, odd minor dims -- DMA copy is shape-agnostic).
    module = ReasoningsJAX([2, 3, 3], k1)
    out = jax.block_until_ready(module())
    assert out.shape == (8, 3, 2), out.shape
    assert out.dtype == jnp.float32
    assert bool(jnp.allclose(out, module.reasonings)), "forward mismatch (case 1)"

    # Case 2: 4 classes x 16 components each -> [64, 4, 2].
    module2 = ReasoningsJAX([16, 16, 16, 16], k2)
    out2 = jax.block_until_ready(module2())
    assert out2.shape == (64, 4, 2), out2.shape
    assert bool(jnp.allclose(out2, module2.reasonings)), "forward mismatch (case 2)"

    print("KERNEL_OK")
</pallas_src>

<mosaic_0001>
module attributes {stable_mosaic.version = 11 : i64} {
  func.func @_dma_copy_kernel(%arg0: memref<8x3x2xf32, #tpu.memory_space<any>>, %arg1: memref<8x3x2xf32, #tpu.memory_space<any>>, %arg2: memref<!tpu.dma_semaphore, #tpu.memory_space<semaphore_mem>>) attributes {dimension_semantics = [], scalar_prefetch = 0 : i64, scratch_operands = 1 : i64, tpu.core_type = #tpu.core_type<tc>} {
    tpu.enqueue_dma source(%arg0 : memref<8x3x2xf32, #tpu.memory_space<any>>) target(%arg1 : memref<8x3x2xf32, #tpu.memory_space<any>>) target_semaphore(%arg2 : memref<!tpu.dma_semaphore, #tpu.memory_space<semaphore_mem>>)
    tpu.wait_dma2 semaphore(%arg2 : memref<!tpu.dma_semaphore, #tpu.memory_space<semaphore_mem>>) src(%arg0 : memref<8x3x2xf32, #tpu.memory_space<any>>) dst(%arg1 : memref<8x3x2xf32, #tpu.memory_space<any>>)
    return
  }
}

</mosaic_0001>

<llo_original>
// kernel: tpu_custom_call.1
$region0: #{tpu_custom_call.1}
  #allocation0 [shape = 'u32[]', space=smem, size = 0x4, offset = 0x4, fixed_abs, tag = 'smem constant byte address 0x4 - core index']
  #allocation1 [shape = 'u32[144,128]{1,0:T(1,128)}', space=vmem, size = 0x12000, scoped, tag = 'internal scratch']
  #allocation2 [shape = 's32[1]{0}', space=sflag, size = 0x4, scoped, tag = 'scratch operand']
  #allocation3 [shape = 's32[]', space=sflag, size = 0x4, offset = 0, fixed_abs, tag = 'sflag constant byte address 0x0 - dummy sync flag']
  %s0 = inlined_call_operand.vmem [shape: f32[8,3,2], index: 0, kind: input, shape index: {}]
  %s1 = inlined_call_operand.vmem [shape: f32[8,3,2], index: 1, kind: output, shape index: {}]
  %s2 = sld [smem:[#allocation0]]
  $region39: #{tpu_custom_call.1} parent=0
    _
  %s4 = ssub.s32 1, %s2
  %s5 = scalar_select 0, %s4, %s2
  %p7 = scmp.lt.u32.totalorder 3, 8
  %p8 = pneg %p7
  // Predicated region
  $region2: #{tpu_custom_call.1} parent=0 // pred_check
    _
  $region3: #{tpu_custom_call.1} parent=0 // pred_check_branch
    %10 = sbr.rel (%p7) target = $region5
  $region4: #{tpu_custom_call.1} parent=0 // pred_region
    %s39 = sand.u32 3, 7
    %p40 = scmp.eq.s32.totalorder %s39, 0
    %p41 = pneg %p40
    // Predicated region
    $region17: #{tpu_custom_call.1} parent=4 // pred_check
      _
    $region18: #{tpu_custom_call.1} parent=4 // pred_check_branch
      %43 = sbr.rel (%p40) target = $region20
    $region19: #{tpu_custom_call.1} parent=4 // pred_region
      %s44 = sand.u32 3, 7
      %s45 = ssub.s32 3, %s44
      %s46 = scalar_lea.vmem %s0, %s45
      %s47 = ssub.s32 3, %s44
      %s48 = scalar_lea.vmem %s1, %s47
      loop: start=0, step=1, limit=1
      $region21: #{tpu_custom_call.1} parent=19 // loop_pre_header
        _
      $region22: #{tpu_custom_call.1} parent=19 // loop_header
        %s50 = sphi 0, %s54
        %p51 = scmp.ge.s32.totalorder %s50, 1
        %s55 = sphi %s0, %s0
        %s56 = sphi %s1, %s1
      $region23: #{tpu_custom_call.1} parent=19 // loop_header_branch
        %53 = sbr.rel (%p51) target = $region27
      $region24: #{tpu_custom_call.1} parent=19 // loop_body
        _
      $region25: #{tpu_custom_call.1} parent=19 // loop_footer
        %s54 = sadd.s32 1, %s50
      $region26: #{tpu_custom_call.1} parent=19 // loop_footer_branch
        %49 = sbr.rel target = $region22
      $region27: #{tpu_custom_call.1} parent=19 // loop_exit
        _
      %s57 = sshllo.u32 0, %s44
      loop: start=0, step=1, limit=1
      $region28: #{tpu_custom_call.1} parent=19 // loop_pre_header
        _
      $region29: #{tpu_custom_call.1} parent=19 // loop_header
        %s59 = sphi 0, %s63
        %p60 = scmp.ge.s32.totalorder %s59, 1
        %s64 = sphi %s46, %s46
        %s65 = sphi %s48, %s48
      $region30: #{tpu_custom_call.1} parent=19 // loop_header_branch
        %62 = sbr.rel (%p60) target = $region34
      $region31: #{tpu_custom_call.1} parent=19 // loop_body
        %v66 = vld [vmem:[%s64] sm:%s57]
        %67 = vst [vmem:[%s65] sm:%s57] %v66
        %v68 = vld [vmem:[%s64 + $0x4] sm:%s57]
        %69 = vst [vmem:[%s65 + $0x4] sm:%s57] %v68
        %v70 = vld [vmem:[%s64 + $0x8] sm:%s57]
        %71 = vst [vmem:[%s65 + $0x8] sm:%s57] %v70
        %v72 = vld [vmem:[%s64 + $0xc] sm:%s57]
        %73 = vst [vmem:[%s65 + $0xc] sm:%s57] %v72
        %v74 = vld [vmem:[%s64 + $0x10] sm:%s57]
        %75 = vst [vmem:[%s65 + $0x10] sm:%s57] %v74
        %v76 = vld [vmem:[%s64 + $0x14] sm:%s57]
        %77 = vst [vmem:[%s65 + $0x14] sm:%s57] %v76
        %v78 = vld [vmem:[%s64 + $0x18] sm:%s57]
        %79 = vst [vmem:[%s65 + $0x18] sm:%s57] %v78
        %v80 = vld [vmem:[%s64 + $0x1c] sm:%s57]
        %81 = vst [vmem:[%s65 + $0x1c] sm:%s57] %v80
      $region32: #{tpu_custom_call.1} parent=19 // loop_footer
        %s63 = sadd.s32 1, %s59
      $region33: #{tpu_custom_call.1} parent=19 // loop_footer_branch
        %58 = sbr.rel target = $region29
      $region34: #{tpu_custom_call.1} parent=19 // loop_exit
        _
    $region20: #{tpu_custom_call.1} parent=4 // pred_fallthru
      _
  $region5: #{tpu_custom_call.1} parent=0 // pred_fallthru
    _
  // Predicated region
  $region6: #{tpu_custom_call.1} parent=0 // pred_check
    %p11 = pneg %p7
  $region7: #{tpu_custom_call.1} parent=0 // pred_check_branch
    %13 = sbr.rel (%p11) target = $region9
  $region8: #{tpu_custom_call.1} parent=0 // pred_region
    %s14 = sshllo.u32 0, 3
    loop: start=0, step=1, limit=1
    $region10: #{tpu_custom_call.1} parent=8 // loop_pre_header
      _
    $region11: #{tpu_custom_call.1} parent=8 // loop_header
      %s16 = sphi 0, %s20
      %p17 = scmp.ge.s32.totalorder %s16, 1
      %s21 = sphi %s0, %s0
      %s22 = sphi %s1, %s1
    $region12: #{tpu_custom_call.1} parent=8 // loop_header_branch
      %19 = sbr.rel (%p17) target = $region16
    $region13: #{tpu_custom_call.1} parent=8 // loop_body
      %v23 = vld [vmem:[%s21] sm:%s14]
      %24 = vst [vmem:[%s22] sm:%s14] %v23
      %v25 = vld [vmem:[%s21 + $0x4] sm:%s14]
      %26 = vst [vmem:[%s22 + $0x4] sm:%s14] %v25
      %v27 = vld [vmem:[%s21 + $0x8] sm:%s14]
      %28 = vst [vmem:[%s22 + $0x8] sm:%s14] %v27
      %v29 = vld [vmem:[%s21 + $0xc] sm:%s14]
      %30 = vst [vmem:[%s22 + $0xc] sm:%s14] %v29
      %v31 = vld [vmem:[%s21 + $0x10] sm:%s14]
      %32 = vst [vmem:[%s22 + $0x10] sm:%s14] %v31
      %v33 = vld [vmem:[%s21 + $0x14] sm:%s14]
      %34 = vst [vmem:[%s22 + $0x14] sm:%s14] %v33
      %v35 = vld [vmem:[%s21 + $0x18] sm:%s14]
      %36 = vst [vmem:[%s22 + $0x18] sm:%s14] %v35
      %v37 = vld [vmem:[%s21 + $0x1c] sm:%s14]
      %38 = vst [vmem:[%s22 + $0x1c] sm:%s14] %v37
    $region14: #{tpu_custom_call.1} parent=8 // loop_footer
      %s20 = sadd.s32 1, %s16
    $region15: #{tpu_custom_call.1} parent=8 // loop_footer_branch
      %15 = sbr.rel target = $region11
    $region16: #{tpu_custom_call.1} parent=8 // loop_exit
      _
  $region9: #{tpu_custom_call.1} parent=0 // pred_fallthru
    _
  // Predicated region
  $region35: #{tpu_custom_call.1} parent=0 // pred_check
    _
  $region36: #{tpu_custom_call.1} parent=0 // pred_check_branch
    %84 = sbr.rel (0) target = $region38
  $region37: #{tpu_custom_call.1} parent=0 // pred_region
    %85 = vsyncadd [#allocation2], 384
  $region38: #{tpu_custom_call.1} parent=0 // pred_fallthru
    _
  %s86 = smul.u32 8, 3
  %s87 = smul.u32 %s86, 1
  %s88 = sshll.u32 %s87, 4
  %89 = dma.done [#allocation2], %s88
  %90 = vsyncmov [#allocation2]
  %s91 = vpop.sfrf %90
  %p92 = scmp.eq.s32.totalorder %s91, 0
  %p93 = pneg %p92
  %95 = shalt.err (%p93)

</llo_original>
